<compile_context>
chip_gen: v6e
topology: v6e:2x2x1
jax: 0.10.0
libtpu: 0.0.40
codegen_flags: <defaults>
</compile_context>

<pallas_src>
import functools

import jax
import jax.numpy as jnp
import numpy as np
from jax.experimental import pallas as pl
from jax.experimental.pallas import tpu as pltpu


def _round_up(a, b):
    return ((a + b - 1) // b) * b


_PAD_BIAS = 1.0e7     # raw bias for padded reference columns -> key clips to val_max
_NEG_OFFSET = 0.6     # neg_score = 0.5*||r||^2 - x.r  lies in ~[-0.5-eps, 1.5+eps]
_NEG_RANGE = 2.25     # quantization range for (neg_score + offset)


def _knn_kernel(x_ref, rbias_ref, rt_ref, out_ref, xn_ref, best_ref, *,
                k, neg_inv_sigma, idx_bits, val_max, scale):
    j = pl.program_id(1)
    nr = pl.num_programs(1)
    INT_BIG = jnp.int32(2**31 - 1)

    # --- once per batch tile: F.normalize(x, dim=1) into a VMEM scratch (hoisted
    #     out of the R loop), plus running-best init. ---
    @pl.when(j == 0)
    def _init():
        x = x_ref[...].astype(jnp.float32)                         # (TB, D)
        s = jnp.sum(x * x, axis=1, keepdims=True)
        xn = x * jax.lax.rsqrt(jnp.maximum(s, jnp.float32(1e-24)))
        xn_ref[...] = xn.astype(xn_ref.dtype)
        best_ref[...] = jnp.full(best_ref.shape, val_max, jnp.int32)

    # --- MXU: x_n . r^T for this chunk of reference columns (f32 accumulate). ---
    xr = jnp.dot(xn_ref[...], rt_ref[...],
                 preferred_element_type=jnp.float32)               # (TB, TR)

    # --- packed key: quantized (0.5*||r||^2 - x.r + off) in the high bits, lane
    #     index in the low bits.  Padded columns carry a huge bias and clip to
    #     val_max, so they can never displace a valid candidate (no extra mask). ---
    bias = (rbias_ref[...] * jnp.float32(scale)
            + jnp.float32(_NEG_OFFSET * scale))                    # (1, TR), cheap
    qf = bias - xr * jnp.float32(scale)                            # (TB, TR)
    qf = jnp.clip(qf, 0.0, float(val_max))
    qi = qf.astype(jnp.int32)
    lane_tr = jax.lax.broadcasted_iota(jnp.int32, qi.shape, 1)
    packed = (qi << idx_bits) | lane_tr                            # (TB, TR)

    lane_out = jax.lax.broadcasted_iota(jnp.int32, best_ref.shape, 1)

    # --- stage 1: chunk-local top-k (smallest key == smallest distance).
    #     No writeback: each pass filters with `key > previously selected key`
    #     (keys are unique because of the lane-index low bits). ---
    merged = best_ref[...]                           # lanes [0, k): running best value-keys
    prev = jnp.full((packed.shape[0], 1), -1, jnp.int32)
    for i in range(k):                               # k is tiny & static -> unrolled
        cand = jnp.where(packed > prev, packed, INT_BIG)
        prev = jnp.min(cand, axis=1, keepdims=True)                # (TB, 1)
        merged = jnp.where(lane_out == (k + i), prev >> idx_bits, merged)

    # --- stage 2: merge chunk top-k with the running best over one LANE-wide vreg. ---
    packed2 = (merged << idx_bits) | lane_out
    new_best = jnp.full(best_ref.shape, val_max, jnp.int32)
    prev2 = jnp.full((merged.shape[0], 1), -1, jnp.int32)
    for i in range(k):
        cand2 = jnp.where(packed2 > prev2, packed2, INT_BIG)
        prev2 = jnp.min(cand2, axis=1, keepdims=True)
        new_best = jnp.where(lane_out == i, prev2 >> idx_bits, new_best)
    best_ref[...] = new_best

    # --- finalize on the last chunk: decode key -> d -> weights -> L1 normalize. ---
    @pl.when(j == nr - 1)
    def _finalize():
        q = new_best.astype(jnp.float32)                           # (TB, LANE)
        neg = q * jnp.float32(1.0 / scale) - jnp.float32(_NEG_OFFSET)
        d2 = jnp.maximum(1.0 + 2.0 * neg, 0.0)     # ||x_n||^2 = 1, bias carries ||r||^2
        d = jnp.sqrt(d2)
        w = jnp.where(lane_out < k,
                      jnp.exp(d * jnp.float32(neg_inv_sigma)),
                      jnp.float32(0.0))
        denom = jnp.maximum(jnp.sum(w, axis=1, keepdims=True), jnp.float32(1e-12))
        out_ref[...] = (w * pl.reciprocal(denom, approx=True)).astype(out_ref.dtype)


def prepare_reference(reference_points, *, tr=1024, use_bf16=True):
    """Preprocess the (rarely updated) reference buffer once, at update() time.

    Produces the transposed / padded / optionally bf16 reference operand and the
    (1, R_pad) raw bias row 0.5*||r||^2 (padded columns get a huge bias so they
    are never selected).  Cache the returned dict and pass it as `prepared=` to
    knn_mapper_forward to avoid re-doing the transpose/cast every forward call.
    """
    ref = jnp.asarray(reference_points, jnp.float32)
    R, D = ref.shape
    if R <= tr:
        TR, R_pad = R, R
    else:
        TR = _round_up(tr, 128)
        R_pad = _round_up(R, TR)
    ref_t = ref.T                                                   # (D, R)
    rbias = 0.5 * jnp.sum(ref * ref, axis=1)[None, :]               # (1, R)
    if R_pad != R:
        ref_t = jnp.pad(ref_t, ((0, 0), (0, R_pad - R)))
        rbias = jnp.pad(rbias, ((0, 0), (0, R_pad - R)), constant_values=_PAD_BIAS)
    if use_bf16:
        ref_t = ref_t.astype(jnp.bfloat16)
    return dict(ref_t=ref_t, rbias=rbias, R=R, D=D, TR=TR, R_pad=R_pad,
                use_bf16=use_bf16)


def knn_mapper_forward(x, reference_points=None, k=5, sigma=1.0, *,
                       tb=256, tr=1024, use_bf16=True, prepared=None,
                       vmem_limit_bytes=48 * 1024 * 1024):
    """Pallas implementation of KNNMapper.forward.

    `use_bf16` feeds the MXU bf16 operands (f32 accumulate); set False for
    bit-closer parity with the f32 PyTorch reference on near-ties.  Keep
    tr <= 1024 on v5e (16 MiB default scoped VMEM).
    """
    B, Dx = x.shape
    if reference_points is None and prepared is None:
        return jnp.zeros((B, k), jnp.float32)        # module's empty-buffer branch

    if prepared is None:
        prepared = prepare_reference(reference_points, tr=tr, use_bf16=use_bf16)
    ref_t, rbias = prepared["ref_t"], prepared["rbias"]
    R, D, TR, R_pad = prepared["R"], prepared["D"], prepared["TR"], prepared["R_pad"]
    use_bf16 = prepared["use_bf16"]

    assert D == Dx, "feature dim mismatch"
    assert 1 <= k <= R, "k must be in [1, num_reference_points]"
    assert k <= 128, "k must be small enough to unroll the selection loop"

    LANE = max(128, _round_up(2 * k, 128))   # merge buffer needs 2k lanes; out sliced to k

    # Batch tiling ('parallel' axis).  Keep >= 2 B blocks whenever possible so the
    # grid shards across both v7x TensorCores (no-op on v5e/v6e).
    TB = min(_round_up(tb, 8), max(8, _round_up(-(-B // 2), 8)))
    B_pad = _round_up(B, TB)

    # Packed-key layout: high bits = quantized score, low bits = lane index.
    idx_bits = max((TR - 1).bit_length(), (LANE - 1).bit_length(), 1)
    val_bits = 31 - idx_bits
    val_max = (1 << val_bits) - 1
    scale = float(val_max - 1) / _NEG_RANGE

    x_p = x.astype(jnp.float32)
    if B_pad != B:
        x_p = jnp.pad(x_p, ((0, B_pad - B), (0, 0)))   # zero rows are harmless; sliced off

    kernel = functools.partial(
        _knn_kernel, k=k, neg_inv_sigma=-1.0 / float(sigma),
        idx_bits=idx_bits, val_max=val_max, scale=scale)

    grid = (B_pad // TB, R_pad // TR)
    n_btiles = grid[0]
    out = pl.pallas_call(
        kernel,
        out_shape=jax.ShapeDtypeStruct((B_pad, LANE), jnp.float32),
        grid_spec=pltpu.PrefetchScalarGridSpec(
            num_scalar_prefetch=0,
            grid=grid,
            in_specs=[
                pl.BlockSpec((TB, D), lambda i, j: (i, 0)),   # x block resident across R steps
                pl.BlockSpec((1, TR), lambda i, j: (0, j)),   # 0.5*||r||^2 bias row (pads folded in)
                pl.BlockSpec((D, TR), lambda i, j: (0, j)),   # reference chunks streamed
            ],
            out_specs=pl.BlockSpec((TB, LANE), lambda i, j: (i, 0)),
            scratch_shapes=[
                pltpu.VMEM((TB, D), jnp.bfloat16 if use_bf16 else jnp.float32),
                pltpu.VMEM((TB, LANE), jnp.int32),
            ],
        ),
        compiler_params=pltpu.CompilerParams(
            dimension_semantics=("parallel", "arbitrary"),
            vmem_limit_bytes=vmem_limit_bytes),
        cost_estimate=pl.CostEstimate(
            flops=2 * B_pad * R_pad * D,
            transcendentals=B_pad * (k + 2),
            bytes_accessed=(4 * B_pad * D + 4 * B_pad * LANE
                            + n_btiles * (ref_t.size * ref_t.dtype.itemsize
                                          + rbias.size * 4))),
    )(x_p, rbias, ref_t)
    return out[:B, :k]


def _reference_forward(x, ref, k, sigma):
    """Pure-JAX port of the PyTorch forward, for a sanity check."""
    xn = x / jnp.maximum(jnp.linalg.norm(x, axis=1, keepdims=True), 1e-12)
    d2 = (jnp.sum(xn * xn, axis=1, keepdims=True)
          + jnp.sum(ref * ref, axis=1)[None, :] - 2.0 * xn @ ref.T)
    d = jnp.sqrt(jnp.maximum(d2, 0.0))
    topd = -jax.lax.top_k(-d, k)[0]          # k smallest, ascending
    w = jnp.exp(-topd / sigma)
    return w / jnp.maximum(jnp.sum(w, axis=1, keepdims=True), 1e-12)


if __name__ == "__main__":
    B, D, R, K = 8, 32, 16, 5   # batch, feature_dim, num reference points, k
    SIGMA = 1.0

    key = jax.random.PRNGKey(0)
    kx, kr = jax.random.split(key)
    x = jax.random.normal(kx, (B, D), dtype=jnp.float32)

    # Deterministic "buffer" exactly as KNNMapper.update() would store it (L2-normalized rows).
    ref_raw = jax.random.normal(kr, (R, D), dtype=jnp.float32)
    ref_norm = jnp.sqrt(jnp.sum(ref_raw * ref_raw, axis=1, keepdims=True))
    reference_points = ref_raw / jnp.maximum(ref_norm, 1e-12)

    # bf16 MXU path, with the reference prepared once (as update() would cache it).
    prepared = prepare_reference(reference_points, tr=1024, use_bf16=True)
    out = knn_mapper_forward(x, k=K, sigma=SIGMA, prepared=prepared)
    jax.block_until_ready(out)
    assert out.shape == (B, K)

    expected = _reference_forward(x, reference_points, K, SIGMA)
    assert np.allclose(np.asarray(out), np.asarray(expected), atol=5e-2), (
        "bf16 kernel output deviates from reference beyond bf16 tolerance")

    # f32 MXU path for tighter parity (quantized selection keys; error ~1e-6 in d^2).
    out_f32 = knn_mapper_forward(x, reference_points, k=K, sigma=SIGMA, use_bf16=False)
    jax.block_until_ready(out_f32)
    assert np.allclose(np.asarray(out_f32), np.asarray(expected), atol=1e-3), (
        "f32 kernel output deviates from reference")

    print("KERNEL_OK")
</pallas_src>

<mosaic_0001>
module attributes {stable_mosaic.version = 11 : i64} {
  func.func @_knn_kernel(%arg0: i32, %arg1: i32, %arg2: memref<8x32xf32, #tpu.memory_space<vmem>>, %arg3: memref<1x16xf32, #tpu.memory_space<vmem>>, %arg4: memref<32x16xbf16, #tpu.memory_space<vmem>>, %arg5: memref<8x128xf32, #tpu.memory_space<vmem>>, %arg6: memref<8x32xbf16, #tpu.memory_space<vmem>>, %arg7: memref<8x128xi32, #tpu.memory_space<vmem>>) attributes {dimension_semantics = [#tpu.dimension_semantics<parallel>, #tpu.dimension_semantics<arbitrary>], iteration_bounds = array<i64: 1, 1>, scalar_prefetch = 0 : i64, scratch_operands = 2 : i64, tpu.core_type = #tpu.core_type<tc>, window_params = [{transform_indices = @transform_0, window_bounds = array<i64: 8, 32>}, {transform_indices = @transform_1, window_bounds = array<i64: 1, 16>}, {transform_indices = @transform_2, window_bounds = array<i64: 32, 16>}, {transform_indices = @transform_3, window_bounds = array<i64: 8, 128>}]} {
    %c0_i32 = arith.constant 0 : i32
    %0 = arith.cmpi eq, %arg1, %c0_i32 : i32
    %1 = arith.extui %0 : i1 to i32
    %c0_i32_0 = arith.constant 0 : i32
    %2 = arith.cmpi ne, %1, %c0_i32_0 : i32
    scf.if %2 {
      %c0_50 = arith.constant 0 : index
      %c0_51 = arith.constant 0 : index
      %166 = vector.load %arg2[%c0_50, %c0_51] : memref<8x32xf32, #tpu.memory_space<vmem>>, vector<8x32xf32>
      %167 = arith.mulf %166, %166 : vector<8x32xf32>
      %cst_52 = arith.constant dense<0.000000e+00> : vector<8xf32>
      %168 = vector.multi_reduction <add>, %167, %cst_52 [1] : vector<8x32xf32> to vector<8xf32>
      %169 = vector.shape_cast %168 : vector<8xf32> to vector<8x1xf32>
      %cst_53 = arith.constant 1.000000e-24 : f32
      %170 = vector.broadcast %cst_53 : f32 to vector<8x1xf32>
      %171 = arith.maximumf %169, %170 : vector<8x1xf32>
      %172 = math.rsqrt %171 : vector<8x1xf32>
      %173 = vector.broadcast %172 : vector<8x1xf32> to vector<8x32xf32>
      %174 = arith.mulf %166, %173 : vector<8x32xf32>
      %175 = arith.truncf %174 : vector<8x32xf32> to vector<8x32xbf16>
      %c0_54 = arith.constant 0 : index
      %c0_55 = arith.constant 0 : index
      %176 = vector.load %arg6[%c0_54, %c0_55] : memref<8x32xbf16, #tpu.memory_space<vmem>>, vector<8x32xbf16>
      tpu.vector_store %arg6[%c0_54, %c0_55], %175 {strides = array<i32>} : memref<8x32xbf16, #tpu.memory_space<vmem>>, vector<8x32xbf16>,
      %c16777215_i32_56 = arith.constant 16777215 : i32
      %177 = vector.broadcast %c16777215_i32_56 : i32 to vector<8x128xi32>
      %c0_57 = arith.constant 0 : index
      %c0_58 = arith.constant 0 : index
      %178 = vector.load %arg7[%c0_57, %c0_58] : memref<8x128xi32, #tpu.memory_space<vmem>>, vector<8x128xi32>
      tpu.vector_store %arg7[%c0_57, %c0_58], %177 {strides = array<i32>} : memref<8x128xi32, #tpu.memory_space<vmem>>, vector<8x128xi32>,
    } else {
    }
    %c0 = arith.constant 0 : index
    %c0_1 = arith.constant 0 : index
    %3 = vector.load %arg6[%c0, %c0_1] : memref<8x32xbf16, #tpu.memory_space<vmem>>, vector<8x32xbf16>
    %c0_2 = arith.constant 0 : index
    %c0_3 = arith.constant 0 : index
    %4 = vector.load %arg4[%c0_2, %c0_3] : memref<32x16xbf16, #tpu.memory_space<vmem>>, vector<32x16xbf16>
    %cst = arith.constant dense<0.000000e+00> : vector<8x16xf32>
    %5 = tpu.matmul %3, %4, %cst {dimension_numbers = #tpu.dot_dimension_numbers<[1], [0], [0], [1], [0, 0, 1, 1], [], []>} : vector<8x32xbf16>, vector<32x16xbf16>, vector<8x16xf32> -> vector<8x16xf32>
    %c0_4 = arith.constant 0 : index
    %c0_5 = arith.constant 0 : index
    %6 = vector.load %arg3[%c0_4, %c0_5] : memref<1x16xf32, #tpu.memory_space<vmem>>, vector<1x16xf32>
    %cst_6 = arith.constant 7456539.5 : f32
    %7 = vector.broadcast %cst_6 : f32 to vector<1x16xf32>
    %8 = arith.mulf %6, %7 : vector<1x16xf32>
    %cst_7 = arith.constant 4473923.5 : f32
    %9 = vector.broadcast %cst_7 : f32 to vector<1x16xf32>
    %10 = arith.addf %8, %9 : vector<1x16xf32>
    %cst_8 = arith.constant 7456539.5 : f32
    %11 = vector.broadcast %cst_8 : f32 to vector<8x16xf32>
    %12 = arith.mulf %5, %11 : vector<8x16xf32>
    %13 = vector.broadcast %10 : vector<1x16xf32> to vector<8x16xf32>
    %14 = arith.subf %13, %12 : vector<8x16xf32>
    %cst_9 = arith.constant 0.000000e+00 : f32
    %cst_10 = arith.constant 0x4B7FFFFF : f32
    %15 = vector.broadcast %cst_9 : f32 to vector<8x16xf32>
    %16 = arith.maximumf %15, %14 : vector<8x16xf32>
    %17 = vector.broadcast %cst_10 : f32 to vector<8x16xf32>
    %18 = arith.minimumf %17, %16 : vector<8x16xf32>
    %19 = arith.fptosi %18 : vector<8x16xf32> to vector<8x16xi32>
    %20 = tpu.iota {dimensions = array<i32: 1>} : vector<8x16xi32>
    %c7_i32 = arith.constant 7 : i32
    %21 = vector.broadcast %c7_i32 : i32 to vector<8x16xi32>
    %22 = arith.shli %19, %21 : vector<8x16xi32>
    %23 = arith.ori %22, %20 : vector<8x16xi32>
    %24 = tpu.iota {dimensions = array<i32: 1>} : vector<8x128xi32>
    %c0_11 = arith.constant 0 : index
    %c0_12 = arith.constant 0 : index
    %25 = vector.load %arg7[%c0_11, %c0_12] : memref<8x128xi32, #tpu.memory_space<vmem>>, vector<8x128xi32>
    %c-1_i32 = arith.constant -1 : i32
    %26 = vector.broadcast %c-1_i32 : i32 to vector<8x1xi32>
    %27 = vector.broadcast %26 : vector<8x1xi32> to vector<8x16xi32>
    %28 = arith.cmpi sgt, %23, %27 : vector<8x16xi32>
    %c2147483647_i32 = arith.constant 2147483647 : i32
    %29 = vector.broadcast %c2147483647_i32 : i32 to vector<8x16xi32>
    %30 = arith.select %28, %23, %29 : vector<8x16xi1>, vector<8x16xi32>
    %cst_13 = arith.constant dense<2147483647> : vector<8xi32>
    %31 = vector.multi_reduction <minsi>, %30, %cst_13 [1] : vector<8x16xi32> to vector<8xi32>
    %32 = vector.shape_cast %31 : vector<8xi32> to vector<8x1xi32>
    %c5_i32 = arith.constant 5 : i32
    %33 = vector.broadcast %c5_i32 : i32 to vector<8x128xi32>
    %34 = arith.cmpi eq, %24, %33 : vector<8x128xi32>
    %c7_i32_14 = arith.constant 7 : i32
    %35 = vector.broadcast %c7_i32_14 : i32 to vector<8x1xi32>
    %36 = arith.shrsi %32, %35 : vector<8x1xi32>
    %37 = vector.shape_cast %36 : vector<8x1xi32> to vector<8x1xi32>
    %38 = vector.broadcast %37 : vector<8x1xi32> to vector<8x128xi32>
    %39 = arith.select %34, %38, %25 : vector<8x128xi1>, vector<8x128xi32>
    %40 = vector.broadcast %32 : vector<8x1xi32> to vector<8x16xi32>
    %41 = arith.cmpi sgt, %23, %40 : vector<8x16xi32>
    %c2147483647_i32_15 = arith.constant 2147483647 : i32
    %42 = vector.broadcast %c2147483647_i32_15 : i32 to vector<8x16xi32>
    %43 = arith.select %41, %23, %42 : vector<8x16xi1>, vector<8x16xi32>
    %cst_16 = arith.constant dense<2147483647> : vector<8xi32>
    %44 = vector.multi_reduction <minsi>, %43, %cst_16 [1] : vector<8x16xi32> to vector<8xi32>
    %45 = vector.shape_cast %44 : vector<8xi32> to vector<8x1xi32>
    %c6_i32 = arith.constant 6 : i32
    %46 = vector.broadcast %c6_i32 : i32 to vector<8x128xi32>
    %47 = arith.cmpi eq, %24, %46 : vector<8x128xi32>
    %c7_i32_17 = arith.constant 7 : i32
    %48 = vector.broadcast %c7_i32_17 : i32 to vector<8x1xi32>
    %49 = arith.shrsi %45, %48 : vector<8x1xi32>
    %50 = vector.shape_cast %49 : vector<8x1xi32> to vector<8x1xi32>
    %51 = vector.broadcast %50 : vector<8x1xi32> to vector<8x128xi32>
    %52 = arith.select %47, %51, %39 : vector<8x128xi1>, vector<8x128xi32>
    %53 = vector.broadcast %45 : vector<8x1xi32> to vector<8x16xi32>
    %54 = arith.cmpi sgt, %23, %53 : vector<8x16xi32>
    %c2147483647_i32_18 = arith.constant 2147483647 : i32
    %55 = vector.broadcast %c2147483647_i32_18 : i32 to vector<8x16xi32>
    %56 = arith.select %54, %23, %55 : vector<8x16xi1>, vector<8x16xi32>
    %cst_19 = arith.constant dense<2147483647> : vector<8xi32>
    %57 = vector.multi_reduction <minsi>, %56, %cst_19 [1] : vector<8x16xi32> to vector<8xi32>
    %58 = vector.shape_cast %57 : vector<8xi32> to vector<8x1xi32>
    %c7_i32_20 = arith.constant 7 : i32
    %59 = vector.broadcast %c7_i32_20 : i32 to vector<8x128xi32>
    %60 = arith.cmpi eq, %24, %59 : vector<8x128xi32>
    %c7_i32_21 = arith.constant 7 : i32
    %61 = vector.broadcast %c7_i32_21 : i32 to vector<8x1xi32>
    %62 = arith.shrsi %58, %61 : vector<8x1xi32>
    %63 = vector.shape_cast %62 : vector<8x1xi32> to vector<8x1xi32>
    %64 = vector.broadcast %63 : vector<8x1xi32> to vector<8x128xi32>
    %65 = arith.select %60, %64, %52 : vector<8x128xi1>, vector<8x128xi32>
    %66 = vector.broadcast %58 : vector<8x1xi32> to vector<8x16xi32>
    %67 = arith.cmpi sgt, %23, %66 : vector<8x16xi32>
    %c2147483647_i32_22 = arith.constant 2147483647 : i32
    %68 = vector.broadcast %c2147483647_i32_22 : i32 to vector<8x16xi32>
    %69 = arith.select %67, %23, %68 : vector<8x16xi1>, vector<8x16xi32>
    %cst_23 = arith.constant dense<2147483647> : vector<8xi32>
    %70 = vector.multi_reduction <minsi>, %69, %cst_23 [1] : vector<8x16xi32> to vector<8xi32>
    %71 = vector.shape_cast %70 : vector<8xi32> to vector<8x1xi32>
    %c8_i32 = arith.constant 8 : i32
    %72 = vector.broadcast %c8_i32 : i32 to vector<8x128xi32>
    %73 = arith.cmpi eq, %24, %72 : vector<8x128xi32>
    %c7_i32_24 = arith.constant 7 : i32
    %74 = vector.broadcast %c7_i32_24 : i32 to vector<8x1xi32>
    %75 = arith.shrsi %71, %74 : vector<8x1xi32>
    %76 = vector.shape_cast %75 : vector<8x1xi32> to vector<8x1xi32>
    %77 = vector.broadcast %76 : vector<8x1xi32> to vector<8x128xi32>
    %78 = arith.select %73, %77, %65 : vector<8x128xi1>, vector<8x128xi32>
    %79 = vector.broadcast %71 : vector<8x1xi32> to vector<8x16xi32>
    %80 = arith.cmpi sgt, %23, %79 : vector<8x16xi32>
    %c2147483647_i32_25 = arith.constant 2147483647 : i32
    %81 = vector.broadcast %c2147483647_i32_25 : i32 to vector<8x16xi32>
    %82 = arith.select %80, %23, %81 : vector<8x16xi1>, vector<8x16xi32>
    %cst_26 = arith.constant dense<2147483647> : vector<8xi32>
    %83 = vector.multi_reduction <minsi>, %82, %cst_26 [1] : vector<8x16xi32> to vector<8xi32>
    %84 = vector.shape_cast %83 : vector<8xi32> to vector<8x1xi32>
    %c9_i32 = arith.constant 9 : i32
    %85 = vector.broadcast %c9_i32 : i32 to vector<8x128xi32>
    %86 = arith.cmpi eq, %24, %85 : vector<8x128xi32>
    %c7_i32_27 = arith.constant 7 : i32
    %87 = vector.broadcast %c7_i32_27 : i32 to vector<8x1xi32>
    %88 = arith.shrsi %84, %87 : vector<8x1xi32>
    %89 = vector.shape_cast %88 : vector<8x1xi32> to vector<8x1xi32>
    %90 = vector.broadcast %89 : vector<8x1xi32> to vector<8x128xi32>
    %91 = arith.select %86, %90, %78 : vector<8x128xi1>, vector<8x128xi32>
    %c7_i32_28 = arith.constant 7 : i32
    %92 = vector.broadcast %c7_i32_28 : i32 to vector<8x128xi32>
    %93 = arith.shli %91, %92 : vector<8x128xi32>
    %94 = arith.ori %93, %24 : vector<8x128xi32>
    %c16777215_i32 = arith.constant 16777215 : i32
    %95 = vector.broadcast %c16777215_i32 : i32 to vector<8x128xi32>
    %c-1_i32_29 = arith.constant -1 : i32
    %96 = vector.broadcast %c-1_i32_29 : i32 to vector<8x1xi32>
    %97 = vector.broadcast %96 : vector<8x1xi32> to vector<8x128xi32>
    %98 = arith.cmpi sgt, %94, %97 : vector<8x128xi32>
    %c2147483647_i32_30 = arith.constant 2147483647 : i32
    %99 = vector.broadcast %c2147483647_i32_30 : i32 to vector<8x128xi32>
    %100 = arith.select %98, %94, %99 : vector<8x128xi1>, vector<8x128xi32>
    %cst_31 = arith.constant dense<2147483647> : vector<8xi32>
    %101 = vector.multi_reduction <minsi>, %100, %cst_31 [1] : vector<8x128xi32> to vector<8xi32>
    %102 = vector.shape_cast %101 : vector<8xi32> to vector<8x1xi32>
    %c0_i32_32 = arith.constant 0 : i32
    %103 = vector.broadcast %c0_i32_32 : i32 to vector<8x128xi32>
    %104 = arith.cmpi eq, %24, %103 : vector<8x128xi32>
    %c7_i32_33 = arith.constant 7 : i32
    %105 = vector.broadcast %c7_i32_33 : i32 to vector<8x1xi32>
    %106 = arith.shrsi %102, %105 : vector<8x1xi32>
    %107 = vector.shape_cast %106 : vector<8x1xi32> to vector<8x1xi32>
    %108 = vector.broadcast %107 : vector<8x1xi32> to vector<8x128xi32>
    %109 = arith.select %104, %108, %95 : vector<8x128xi1>, vector<8x128xi32>
    %110 = vector.broadcast %102 : vector<8x1xi32> to vector<8x128xi32>
    %111 = arith.cmpi sgt, %94, %110 : vector<8x128xi32>
    %c2147483647_i32_34 = arith.constant 2147483647 : i32
    %112 = vector.broadcast %c2147483647_i32_34 : i32 to vector<8x128xi32>
    %113 = arith.select %111, %94, %112 : vector<8x128xi1>, vector<8x128xi32>
    %cst_35 = arith.constant dense<2147483647> : vector<8xi32>
    %114 = vector.multi_reduction <minsi>, %113, %cst_35 [1] : vector<8x128xi32> to vector<8xi32>
    %115 = vector.shape_cast %114 : vector<8xi32> to vector<8x1xi32>
    %c1_i32 = arith.constant 1 : i32
    %116 = vector.broadcast %c1_i32 : i32 to vector<8x128xi32>
    %117 = arith.cmpi eq, %24, %116 : vector<8x128xi32>
    %c7_i32_36 = arith.constant 7 : i32
    %118 = vector.broadcast %c7_i32_36 : i32 to vector<8x1xi32>
    %119 = arith.shrsi %115, %118 : vector<8x1xi32>
    %120 = vector.shape_cast %119 : vector<8x1xi32> to vector<8x1xi32>
    %121 = vector.broadcast %120 : vector<8x1xi32> to vector<8x128xi32>
    %122 = arith.select %117, %121, %109 : vector<8x128xi1>, vector<8x128xi32>
    %123 = vector.broadcast %115 : vector<8x1xi32> to vector<8x128xi32>
    %124 = arith.cmpi sgt, %94, %123 : vector<8x128xi32>
    %c2147483647_i32_37 = arith.constant 2147483647 : i32
    %125 = vector.broadcast %c2147483647_i32_37 : i32 to vector<8x128xi32>
    %126 = arith.select %124, %94, %125 : vector<8x128xi1>, vector<8x128xi32>
    %cst_38 = arith.constant dense<2147483647> : vector<8xi32>
    %127 = vector.multi_reduction <minsi>, %126, %cst_38 [1] : vector<8x128xi32> to vector<8xi32>
    %128 = vector.shape_cast %127 : vector<8xi32> to vector<8x1xi32>
    %c2_i32 = arith.constant 2 : i32
    %129 = vector.broadcast %c2_i32 : i32 to vector<8x128xi32>
    %130 = arith.cmpi eq, %24, %129 : vector<8x128xi32>
    %c7_i32_39 = arith.constant 7 : i32
    %131 = vector.broadcast %c7_i32_39 : i32 to vector<8x1xi32>
    %132 = arith.shrsi %128, %131 : vector<8x1xi32>
    %133 = vector.shape_cast %132 : vector<8x1xi32> to vector<8x1xi32>
    %134 = vector.broadcast %133 : vector<8x1xi32> to vector<8x128xi32>
    %135 = arith.select %130, %134, %122 : vector<8x128xi1>, vector<8x128xi32>
    %136 = vector.broadcast %128 : vector<8x1xi32> to vector<8x128xi32>
    %137 = arith.cmpi sgt, %94, %136 : vector<8x128xi32>
    %c2147483647_i32_40 = arith.constant 2147483647 : i32
    %138 = vector.broadcast %c2147483647_i32_40 : i32 to vector<8x128xi32>
    %139 = arith.select %137, %94, %138 : vector<8x128xi1>, vector<8x128xi32>
    %cst_41 = arith.constant dense<2147483647> : vector<8xi32>
    %140 = vector.multi_reduction <minsi>, %139, %cst_41 [1] : vector<8x128xi32> to vector<8xi32>
    %141 = vector.shape_cast %140 : vector<8xi32> to vector<8x1xi32>
    %c3_i32 = arith.constant 3 : i32
    %142 = vector.broadcast %c3_i32 : i32 to vector<8x128xi32>
    %143 = arith.cmpi eq, %24, %142 : vector<8x128xi32>
    %c7_i32_42 = arith.constant 7 : i32
    %144 = vector.broadcast %c7_i32_42 : i32 to vector<8x1xi32>
    %145 = arith.shrsi %141, %144 : vector<8x1xi32>
    %146 = vector.shape_cast %145 : vector<8x1xi32> to vector<8x1xi32>
    %147 = vector.broadcast %146 : vector<8x1xi32> to vector<8x128xi32>
    %148 = arith.select %143, %147, %135 : vector<8x128xi1>, vector<8x128xi32>
    %149 = vector.broadcast %141 : vector<8x1xi32> to vector<8x128xi32>
    %150 = arith.cmpi sgt, %94, %149 : vector<8x128xi32>
    %c2147483647_i32_43 = arith.constant 2147483647 : i32
    %151 = vector.broadcast %c2147483647_i32_43 : i32 to vector<8x128xi32>
    %152 = arith.select %150, %94, %151 : vector<8x128xi1>, vector<8x128xi32>
    %cst_44 = arith.constant dense<2147483647> : vector<8xi32>
    %153 = vector.multi_reduction <minsi>, %152, %cst_44 [1] : vector<8x128xi32> to vector<8xi32>
    %154 = vector.shape_cast %153 : vector<8xi32> to vector<8x1xi32>
    %c4_i32 = arith.constant 4 : i32
    %155 = vector.broadcast %c4_i32 : i32 to vector<8x128xi32>
    %156 = arith.cmpi eq, %24, %155 : vector<8x128xi32>
    %c7_i32_45 = arith.constant 7 : i32
    %157 = vector.broadcast %c7_i32_45 : i32 to vector<8x1xi32>
    %158 = arith.shrsi %154, %157 : vector<8x1xi32>
    %159 = vector.shape_cast %158 : vector<8x1xi32> to vector<8x1xi32>
    %160 = vector.broadcast %159 : vector<8x1xi32> to vector<8x128xi32>
    %161 = arith.select %156, %160, %148 : vector<8x128xi1>, vector<8x128xi32>
    %c0_46 = arith.constant 0 : index
    %c0_47 = arith.constant 0 : index
    %162 = vector.load %arg7[%c0_46, %c0_47] : memref<8x128xi32, #tpu.memory_space<vmem>>, vector<8x128xi32>
    tpu.vector_store %arg7[%c0_46, %c0_47], %161 {strides = array<i32>} : memref<8x128xi32, #tpu.memory_space<vmem>>, vector<8x128xi32>,
    %c0_i32_48 = arith.constant 0 : i32
    %163 = arith.cmpi eq, %arg1, %c0_i32_48 : i32
    %164 = arith.extui %163 : i1 to i32
    %c0_i32_49 = arith.constant 0 : i32
    %165 = arith.cmpi ne, %164, %c0_i32_49 : i32
    scf.if %165 {
      %166 = arith.sitofp %161 : vector<8x128xi32> to vector<8x128xf32>
      %cst_50 = arith.constant 1.34110465E-7 : f32
      %167 = vector.broadcast %cst_50 : f32 to vector<8x128xf32>
      %168 = arith.mulf %166, %167 : vector<8x128xf32>
      %cst_51 = arith.constant 6.000000e-01 : f32
      %169 = vector.broadcast %cst_51 : f32 to vector<8x128xf32>
      %170 = arith.subf %168, %169 : vector<8x128xf32>
      %cst_52 = arith.constant 2.000000e+00 : f32
      %171 = vector.broadcast %cst_52 : f32 to vector<8x128xf32>
      %172 = arith.mulf %171, %170 : vector<8x128xf32>
      %cst_53 = arith.constant 1.000000e+00 : f32
      %173 = vector.broadcast %cst_53 : f32 to vector<8x128xf32>
      %174 = arith.addf %173, %172 : vector<8x128xf32>
      %cst_54 = arith.constant 0.000000e+00 : f32
      %175 = vector.broadcast %cst_54 : f32 to vector<8x128xf32>
      %176 = arith.maximumf %174, %175 : vector<8x128xf32>
      %177 = math.sqrt %176 : vector<8x128xf32>
      %c5_i32_55 = arith.constant 5 : i32
      %178 = vector.broadcast %c5_i32_55 : i32 to vector<8x128xi32>
      %179 = arith.cmpi slt, %24, %178 : vector<8x128xi32>
      %cst_56 = arith.constant -1.000000e+00 : f32
      %180 = vector.broadcast %cst_56 : f32 to vector<8x128xf32>
      %181 = arith.mulf %177, %180 : vector<8x128xf32>
      %182 = math.exp %181 : vector<8x128xf32>
      %cst_57 = arith.constant 0.000000e+00 : f32
      %183 = vector.broadcast %cst_57 : f32 to vector<8x128xf32>
      %184 = arith.select %179, %182, %183 : vector<8x128xi1>, vector<8x128xf32>
      %cst_58 = arith.constant dense<0.000000e+00> : vector<8xf32>
      %185 = vector.multi_reduction <add>, %184, %cst_58 [1] : vector<8x128xf32> to vector<8xf32>
      %186 = vector.shape_cast %185 : vector<8xf32> to vector<8x1xf32>
      %cst_59 = arith.constant 9.99999996E-13 : f32
      %187 = vector.broadcast %cst_59 : f32 to vector<8x1xf32>
      %188 = arith.maximumf %186, %187 : vector<8x1xf32>
      %189 = tpu.reciprocal %188 {approx = true} : vector<8x1xf32> -> vector<8x1xf32>
      %190 = vector.broadcast %189 : vector<8x1xf32> to vector<8x128xf32>
      %191 = arith.mulf %184, %190 : vector<8x128xf32>
      %c0_60 = arith.constant 0 : index
      %c0_61 = arith.constant 0 : index
      %192 = vector.load %arg5[%c0_60, %c0_61] : memref<8x128xf32, #tpu.memory_space<vmem>>, vector<8x128xf32>
      tpu.vector_store %arg5[%c0_60, %c0_61], %191 {strides = array<i32>} : memref<8x128xf32, #tpu.memory_space<vmem>>, vector<8x128xf32>,
    } else {
    }
    return
  }
  func.func @transform_0(%arg0: i32, %arg1: i32) -> (i32, i32) {
    %c0_i32 = arith.constant 0 : i32
    %c0_i32_0 = arith.constant 0 : i32
    return %arg0, %c0_i32 : i32, i32
  }
  func.func @transform_1(%arg0: i32, %arg1: i32) -> (i32, i32) {
    %c0_i32 = arith.constant 0 : i32
    %c0_i32_0 = arith.constant 0 : i32
    return %c0_i32, %arg1 : i32, i32
  }
  func.func @transform_2(%arg0: i32, %arg1: i32) -> (i32, i32) {
    %c0_i32 = arith.constant 0 : i32
    %c0_i32_0 = arith.constant 0 : i32
    return %c0_i32, %arg1 : i32, i32
  }
  func.func @transform_3(%arg0: i32, %arg1: i32) -> (i32, i32) {
    %c0_i32 = arith.constant 0 : i32
    %c0_i32_0 = arith.constant 0 : i32
    return %arg0, %c0_i32 : i32, i32
  }
}

</mosaic_0001>

<llo_original>
// kernel: tpu_custom_call.1
$region0: #{tpu_custom_call.1}
  #allocation0 [shape = 'u32[]', space=smem, size = 0x4, offset = 0x4, fixed_abs, tag = 'smem constant byte address 0x4 - core index']
  #allocation1 [shape = 'u32[144,128]{1,0:T(1,128)}', space=vmem, size = 0x12000, scoped, tag = 'internal scratch']
  #allocation2 [shape = 'bf16[8,32]{1,0:T(8,128)(2,1)}', space=vmem, size = 0x800, scoped, tag = 'scratch operand']
  #allocation3 [shape = 's32[8,128]{1,0:T(8,128)}', space=vmem, size = 0x1000, scoped, tag = 'scratch operand']
  %s0 = inlined_call_operand.vmem [shape: f32[8,32], index: 0, kind: input, shape index: {}]
  %s1 = inlined_call_operand.vmem [shape: f32[1,16], index: 1, kind: input, shape index: {}]
  %s2 = inlined_call_operand.vmem [shape: bf16[32,16], index: 2, kind: input, shape index: {}]
  %s3 = inlined_call_operand.hbm [shape: f32[8,128], index: 3, kind: output, shape index: {}]
  %s4 = sld [smem:[#allocation0]]
  $region30: #{tpu_custom_call.1} parent=0
    _
  %s6 = ssub.s32 1, %s4
  %s7 = scalar_select 0, %s6, %s4
  $region1: #{tpu_custom_call.1} parent=0
    #allocation4 [shape = 'u8[4096]{0}', space=vmem, size = 0x1000, scoped, tag = 'output window, operand 0, single buffered']
    #allocation5 [shape = 's32[1]{0}', space=sflag, size = 0x4, scoped, tag = 'scoped memory for tpu_custom_call.1']
    %8 = vsyncpa [#allocation5], 0
    // Predicated region
    $region2: #{tpu_custom_call.1} parent=1 // pred_check
      _
    $region3: #{tpu_custom_call.1} parent=1 // pred_check_branch
      %10 = sbr.rel (0) target = $region5
    $region4: #{tpu_custom_call.1} parent=1 // pred_region
      _
    $region5: #{tpu_custom_call.1} parent=1 // pred_fallthru
      _
    // Predicated region
    $region6: #{tpu_custom_call.1} parent=1 // pred_check
      _
    $region7: #{tpu_custom_call.1} parent=1 // pred_check_branch
      %12 = sbr.rel (0) target = $region9
    $region8: #{tpu_custom_call.1} parent=1 // pred_region
      _
    $region9: #{tpu_custom_call.1} parent=1 // pred_fallthru
      _
    // Predicated region
    $region10: #{tpu_custom_call.1} parent=1 // pred_check
      _
    $region11: #{tpu_custom_call.1} parent=1 // pred_check_branch
      %14 = sbr.rel (0) target = $region13
    $region12: #{tpu_custom_call.1} parent=1 // pred_region
      _
    $region13: #{tpu_custom_call.1} parent=1 // pred_fallthru
      _
    %p16 = scmp.eq.s32.totalorder 0, 0
    // Predicated region
    $region14: #{tpu_custom_call.1} parent=1 // pred_check
      %p17 = pneg %p16
    $region15: #{tpu_custom_call.1} parent=1 // pred_check_branch
      %19 = sbr.rel (%p17) target = $region17
    $region16: #{tpu_custom_call.1} parent=1 // pred_region
      %v20 = vld [vmem:[%s0] sm:$0xff]
      %v21 = vmul.f32 %v20, %v20
      %vm22 = vcmask 261120
      %v23 = vsel %vm22, %v21, 0.0
      %24 = vadd.xlane.f32.xlu0 %v23
      %v25 = vpop.xlane.xlu0 %24
      %v26 = vmax.f32 %v25, 1e-24
      %v27 = vrsqrt.pop %v26
      %v28 = vmul.f32 %v20, %v27
      %v29 = vpack.c.bf16 %v28, %v28
      %vm30 = vcmask 257024
      %31 = vst.msk [vmem:[#allocation2] sm:$0xf] %vm30, %v29
      %32 = vst [vmem:[#allocation3] sm:$0xff] 16777215
    $region17: #{tpu_custom_call.1} parent=1 // pred_fallthru
      _
    %v33 = vld [vmem:[#allocation2] sm:$0xf]
    %v34 = vld [vmem:[%s2] sm:$0xf]
    %v35 = vld [vmem:[%s2 + $0x4] sm:$0xf]
    %v36 = vld [vmem:[%s2 + $0x8] sm:$0xf]
    %v37 = vld [vmem:[%s2 + $0xc] sm:$0xf]
    %v42 = vunpack.c.l.b16 %v34
    %v43 = vunpack.c.l.b16 %v35
    %v44 = vunpack.c.l.b16 %v36
    %v45 = vunpack.c.l.b16 %v37
    %v46 = vpack.c.b16 %v43, %v42
    %v47 = vpack.c.b16 %v45, %v44
    %vm50 = vcmask 261120
    %v52 = vsel %vm50, %v33, 0
    %54 = vmatprep.subr.bf16.mxu0 0
    %55 = vmatpush1.bf16.msra.mxu0 0
    %56 = vmatprep.subr.bf16.mxu0 0
    %57 = vmatpush1.bf16.msra.mxu0 0
    %58 = vmatprep.subr.bf16.mxu0 0
    %59 = vmatpush1.bf16.msra.mxu0 0
    %60 = vmatprep.subr.bf16.mxu0 0
    %61 = vmatpush1.bf16.msra.mxu0 0
    %62 = vmatprep.subr.bf16.mxu0 0
    %63 = vmatpush1.bf16.msra.mxu0 0
    %64 = vmatprep.subr.bf16.mxu0 0
    %65 = vmatpush1.bf16.msra.mxu0 0
    %66 = vmatprep.subr.bf16.mxu0 0
    %67 = vmatpush1.bf16.msra.mxu0 %v47
    %68 = vmatprep.subr.bf16.mxu0 0
    %69 = vmatpush1.bf16.msra.mxu0 %v46
    %70 = vmatprep.subr.bf16.mxu0 0
    %71 = vmatpush2.bf16.msra.mxu0 0
    %72 = vmatprep.subr.bf16.mxu0 0
    %73 = vmatpush2.bf16.msra.mxu0 0
    %74 = vmatprep.subr.bf16.mxu0 0
    %75 = vmatpush2.bf16.msra.mxu0 0
    %76 = vmatprep.subr.bf16.mxu0 0
    %77 = vmatpush2.bf16.msra.mxu0 0
    %78 = vmatprep.subr.bf16.mxu0 0
    %79 = vmatpush2.bf16.msra.mxu0 0
    %80 = vmatprep.subr.bf16.mxu0 0
    %81 = vmatpush2.bf16.msra.mxu0 0
    %82 = vmatprep.subr.bf16.mxu0 0
    %83 = vmatpush2.bf16.msra.mxu0 0
    %84 = vmatprep.subr.bf16.mxu0 0
    %85 = vmatpush2.bf16.msra.mxu0 0
    %86 = vmatprep.mubr.bf16.mxu0 0
    %87 = vmatmul.mubr.bf16.gmra.mxu0 %v52
    %v88 = vpop.f32.mrf.mxu0
    %v89 = vadd.f32 0.0, %v88
    %v90 = vpop.f32.mrf.mxu0
    %v91 = vpop.f32.mrf.mxu0
    %v92 = vpop.f32.mrf.mxu0
    %93 = vdwg.mxu0
    %v94 = vld [vmem:[%s1] sm:$0x1]
    %v95 = vmul.f32 %v94, 7456539.5
    %v96 = vadd.f32 %v95, 4473923.5
    %v97 = vmul.f32 %v89, 7456539.5
    %v99 = vlaneseq
    %v100 = vshrl.u32 %v99, 7
    %v101 = vsub.s32 0, %v100
    %v102 = vrot.slane %v96, %v101
    %v104 = vsub.f32 %v102, %v97
    %v105 = vmax.f32 %v104, 0.0
    %v106 = vmin.f32 %v105, 16777215.0
    %v107 = vcvt.f32.s32.to.zero.pseudo %v106
    %v108 = vlaneseq
    %v109 = vand.u32 %v108, 127
    %v110 = vshll.u32 %v107, 7
    %v111 = vor.u32 %v110, %v109
    %v112 = vld [vmem:[#allocation3] sm:$0xff]
    %vm113 = vcmp.gt.s32.totalorder %v111, 4294967295
    %v114 = vsel %vm113, %v111, 2147483647
    %vm115 = vcmask 130048
    %v116 = vsel %vm115, %v114, 2147483647
    %v117 = vand.u32 %v116, 65535
    %v118 = vshra.s32 %v116, 16
    %v119 = vcvt.s32.f32 %v117
    %v120 = vcvt.s32.f32 %v118
    %121 = vmin.xlane.f32.xlu0 %v120
    %v122 = vpop.xlane.xlu0 %121
    %vm123 = vcmp.eq.f32.partialorder %v120, %v122
    %v124 = vsel %vm123, %v119, inf
    %125 = vmin.xlane.f32.xlu0 %v124
    %v126 = vpop.xlane.xlu0 %125
    %v127 = vcvt.f32.s32 %v126
    %v128 = vcvt.f32.s32 %v122
    %v129 = vshll.u32 %v128, 16
    %v130 = vadd.s32 %v129, %v127
    %vm131 = vcmp.eq.s32.totalorder %v109, 5
    %v132 = vshra.s32 %v130, 7
    %v133 = vsel %vm131, %v132, %v112
    %vm134 = vcmp.gt.s32.totalorder %v111, %v130
    %v135 = vsel %vm134, %v111, 2147483647
    %v136 = vsel %vm115, %v135, 2147483647
    %v137 = vand.u32 %v136, 65535
    %v138 = vshra.s32 %v136, 16
    %v139 = vcvt.s32.f32 %v137
    %v140 = vcvt.s32.f32 %v138
    %141 = vmin.xlane.f32.xlu0 %v140
    %v142 = vpop.xlane.xlu0 %141
    %vm143 = vcmp.eq.f32.partialorder %v140, %v142
    %v144 = vsel %vm143, %v139, inf
    %145 = vmin.xlane.f32.xlu0 %v144
    %v146 = vpop.xlane.xlu0 %145
    %v147 = vcvt.f32.s32 %v146
    %v148 = vcvt.f32.s32 %v142
    %v149 = vshll.u32 %v148, 16
    %v150 = vadd.s32 %v149, %v147
    %vm151 = vcmp.eq.s32.totalorder %v109, 6
    %v152 = vshra.s32 %v150, 7
    %v153 = vsel %vm151, %v152, %v133
    %vm154 = vcmp.gt.s32.totalorder %v111, %v150
    %v155 = vsel %vm154, %v111, 2147483647
    %v156 = vsel %vm115, %v155, 2147483647
    %v157 = vand.u32 %v156, 65535
    %v158 = vshra.s32 %v156, 16
    %v159 = vcvt.s32.f32 %v157
    %v160 = vcvt.s32.f32 %v158
    %161 = vmin.xlane.f32.xlu0 %v160
    %v162 = vpop.xlane.xlu0 %161
    %vm163 = vcmp.eq.f32.partialorder %v160, %v162
    %v164 = vsel %vm163, %v159, inf
    %165 = vmin.xlane.f32.xlu0 %v164
    %v166 = vpop.xlane.xlu0 %165
    %v167 = vcvt.f32.s32 %v166
    %v168 = vcvt.f32.s32 %v162
    %v169 = vshll.u32 %v168, 16
    %v170 = vadd.s32 %v169, %v167
    %vm171 = vcmp.eq.s32.totalorder %v109, 7
    %v172 = vshra.s32 %v170, 7
    %v173 = vsel %vm171, %v172, %v153
    %vm174 = vcmp.gt.s32.totalorder %v111, %v170
    %v175 = vsel %vm174, %v111, 2147483647
    %v176 = vsel %vm115, %v175, 2147483647
    %v177 = vand.u32 %v176, 65535
    %v178 = vshra.s32 %v176, 16
    %v179 = vcvt.s32.f32 %v177
    %v180 = vcvt.s32.f32 %v178
    %181 = vmin.xlane.f32.xlu0 %v180
    %v182 = vpop.xlane.xlu0 %181
    %vm183 = vcmp.eq.f32.partialorder %v180, %v182
    %v184 = vsel %vm183, %v179, inf
    %185 = vmin.xlane.f32.xlu0 %v184
    %v186 = vpop.xlane.xlu0 %185
    %v187 = vcvt.f32.s32 %v186
    %v188 = vcvt.f32.s32 %v182
    %v189 = vshll.u32 %v188, 16
    %v190 = vadd.s32 %v189, %v187
    %vm191 = vcmp.eq.s32.totalorder %v109, 8
    %v192 = vshra.s32 %v190, 7
    %v193 = vsel %vm191, %v192, %v173
    %vm194 = vcmp.gt.s32.totalorder %v111, %v190
    %v195 = vsel %vm194, %v111, 2147483647
    %v196 = vsel %vm115, %v195, 2147483647
    %v197 = vand.u32 %v196, 65535
    %v198 = vshra.s32 %v196, 16
    %v199 = vcvt.s32.f32 %v197
    %v200 = vcvt.s32.f32 %v198
    %201 = vmin.xlane.f32.xlu0 %v200
    %v202 = vpop.xlane.xlu0 %201
    %vm203 = vcmp.eq.f32.partialorder %v200, %v202
    %v204 = vsel %vm203, %v199, inf
    %205 = vmin.xlane.f32.xlu0 %v204
    %v206 = vpop.xlane.xlu0 %205
    %v207 = vcvt.f32.s32 %v206
    %v208 = vcvt.f32.s32 %v202
    %v209 = vshll.u32 %v208, 16
    %v210 = vadd.s32 %v209, %v207
    %vm211 = vcmp.eq.s32.totalorder %v109, 9
    %v212 = vshra.s32 %v210, 7
    %v213 = vsel %vm211, %v212, %v193
    %v214 = vshll.u32 %v213, 7
    %v215 = vor.u32 %v214, %v109
    %vm216 = vcmp.gt.s32.totalorder %v215, 4294967295
    %v217 = vsel %vm216, %v215, 2147483647
    %v218 = vand.u32 %v217, 65535
    %v219 = vshra.s32 %v217, 16
    %v220 = vcvt.s32.f32 %v218
    %v221 = vcvt.s32.f32 %v219
    %222 = vmin.xlane.f32.xlu0 %v221
    %v223 = vpop.xlane.xlu0 %222
    %vm224 = vcmp.eq.f32.partialorder %v221, %v223
    %v225 = vsel %vm224, %v220, inf
    %226 = vmin.xlane.f32.xlu0 %v225
    %v227 = vpop.xlane.xlu0 %226
    %v228 = vcvt.f32.s32 %v227
    %v229 = vcvt.f32.s32 %v223
    %v230 = vshll.u32 %v229, 16
    %v231 = vadd.s32 %v230, %v228
    %vm232 = vcmp.eq.s32.totalorder %v109, 0
    %v233 = vshra.s32 %v231, 7
    %v234 = vsel %vm232, %v233, 16777215
    %vm235 = vcmp.gt.s32.totalorder %v215, %v231
    %v236 = vsel %vm235, %v215, 2147483647
    %v237 = vand.u32 %v236, 65535
    %v238 = vshra.s32 %v236, 16
    %v239 = vcvt.s32.f32 %v237
    %v240 = vcvt.s32.f32 %v238
    %241 = vmin.xlane.f32.xlu0 %v240
    %v242 = vpop.xlane.xlu0 %241
    %vm243 = vcmp.eq.f32.partialorder %v240, %v242
    %v244 = vsel %vm243, %v239, inf
    %245 = vmin.xlane.f32.xlu0 %v244
    %v246 = vpop.xlane.xlu0 %245
    %v247 = vcvt.f32.s32 %v246
    %v248 = vcvt.f32.s32 %v242
    %v249 = vshll.u32 %v248, 16
    %v250 = vadd.s32 %v249, %v247
    %vm251 = vcmp.eq.s32.totalorder %v109, 1
    %v252 = vshra.s32 %v250, 7
    %v253 = vsel %vm251, %v252, %v234
    %vm254 = vcmp.gt.s32.totalorder %v215, %v250
    %v255 = vsel %vm254, %v215, 2147483647
    %v256 = vand.u32 %v255, 65535
    %v257 = vshra.s32 %v255, 16
    %v258 = vcvt.s32.f32 %v256
    %v259 = vcvt.s32.f32 %v257
    %260 = vmin.xlane.f32.xlu0 %v259
    %v261 = vpop.xlane.xlu0 %260
    %vm262 = vcmp.eq.f32.partialorder %v259, %v261
    %v263 = vsel %vm262, %v258, inf
    %264 = vmin.xlane.f32.xlu0 %v263
    %v265 = vpop.xlane.xlu0 %264
    %v266 = vcvt.f32.s32 %v265
    %v267 = vcvt.f32.s32 %v261
    %v268 = vshll.u32 %v267, 16
    %v269 = vadd.s32 %v268, %v266
    %vm270 = vcmp.eq.s32.totalorder %v109, 2
    %v271 = vshra.s32 %v269, 7
    %v272 = vsel %vm270, %v271, %v253
    %vm273 = vcmp.gt.s32.totalorder %v215, %v269
    %v274 = vsel %vm273, %v215, 2147483647
    %v275 = vand.u32 %v274, 65535
    %v276 = vshra.s32 %v274, 16
    %v277 = vcvt.s32.f32 %v275
    %v278 = vcvt.s32.f32 %v276
    %279 = vmin.xlane.f32.xlu0 %v278
    %v280 = vpop.xlane.xlu0 %279
    %vm281 = vcmp.eq.f32.partialorder %v278, %v280
    %v282 = vsel %vm281, %v277, inf
    %283 = vmin.xlane.f32.xlu0 %v282
    %v284 = vpop.xlane.xlu0 %283
    %v285 = vcvt.f32.s32 %v284
    %v286 = vcvt.f32.s32 %v280
    %v287 = vshll.u32 %v286, 16
    %v288 = vadd.s32 %v287, %v285
    %vm289 = vcmp.eq.s32.totalorder %v109, 3
    %v290 = vshra.s32 %v288, 7
    %v291 = vsel %vm289, %v290, %v272
    %vm292 = vcmp.gt.s32.totalorder %v215, %v288
    %v293 = vsel %vm292, %v215, 2147483647
    %v294 = vand.u32 %v293, 65535
    %v295 = vshra.s32 %v293, 16
    %v296 = vcvt.s32.f32 %v294
    %v297 = vcvt.s32.f32 %v295
    %298 = vmin.xlane.f32.xlu0 %v297
    %v299 = vpop.xlane.xlu0 %298
    %vm300 = vcmp.eq.f32.partialorder %v297, %v299
    %v301 = vsel %vm300, %v296, inf
    %302 = vmin.xlane.f32.xlu0 %v301
    %v303 = vpop.xlane.xlu0 %302
    %v304 = vcvt.f32.s32 %v303
    %v305 = vcvt.f32.s32 %v299
    %v306 = vshll.u32 %v305, 16
    %v307 = vadd.s32 %v306, %v304
    %vm308 = vcmp.eq.s32.totalorder %v109, 4
    %v309 = vshra.s32 %v307, 7
    %v310 = vsel %vm308, %v309, %v291
    %311 = vst [vmem:[#allocation3] sm:$0xff] %v310
    // Predicated region
    $region18: #{tpu_custom_call.1} parent=1 // pred_check
      %p312 = pneg %p16
    $region19: #{tpu_custom_call.1} parent=1 // pred_check_branch
      %314 = sbr.rel (%p312) target = $region21
    $region20: #{tpu_custom_call.1} parent=1 // pred_region
      %v315 = vcvt.s32.f32 %v310
      %v316 = vmul.f32 %v315, 1.3411046e-07
      %v317 = vsub.f32 %v316, 0.6
      %v318 = vmul.f32 %v317, 2.0
      %v319 = vadd.f32 %v318, 1.0
      %v320 = vmax.f32 %v319, 0.0
      %v321 = vrsqrt.pop %v320
      %v322 = vmul.f32 %v320, %v321
      %vm323 = vcmp.eq.f32.partialorder %v320, inf
      %v324 = vsel %vm323, %v320, %v322
      %vm325 = vcmp.eq.f32.partialorder %v320, 0.0
      %v326 = vand.u32 %v320, 2147483648
      %v327 = vsel %vm325, %v326, %v324
      %vm328 = vcmp.lt.s32.totalorder %v109, 5
      %v329 = vmul.f32 %v327, -1.0
      %v330 = vmul.f32 %v329, 1.442695
      %v331 = vpow.pop %v330
      %v332 = vsel %vm328, %v331, 0.0
      %333 = vadd.xlane.f32.xlu0 %v332
      %v334 = vpop.xlane.xlu0 %333
      %v335 = vmax.f32 %v334, 1e-12
      %v336 = vrcp.pop %v335
      %v337 = vmul.f32 %v332, %v336
      %338 = vst [vmem:[#allocation4] sm:$0xff] %v337
    $region21: #{tpu_custom_call.1} parent=1 // pred_fallthru
      _
    // Predicated region
    $region22: #{tpu_custom_call.1} parent=1 // pred_check
      _
    $region23: #{tpu_custom_call.1} parent=1 // pred_check_branch
      %340 = sbr.rel (0) target = $region25
    $region24: #{tpu_custom_call.1} parent=1 // pred_region
      %s342 = ssub.s32 128, 128
      %343 = vsyncadd [#allocation5], %s342
      %s345 = sshll.u32 [#allocation4], 4
      %s346 = int_to_ptr.vmem [resolvable:$true] %s345
      %348 = dma.vmem_to_hbm [thread:$0]  %s346, 128, %s3, [#allocation5]
    $region25: #{tpu_custom_call.1} parent=1 // pred_fallthru
      _
    // Predicated region
    $region26: #{tpu_custom_call.1} parent=1 // pred_check
      _
    $region27: #{tpu_custom_call.1} parent=1 // pred_check_branch
      %350 = sbr.rel (0) target = $region29
    $region28: #{tpu_custom_call.1} parent=1 // pred_region
      %351 = dma.done [#allocation5], 128
    $region29: #{tpu_custom_call.1} parent=1 // pred_fallthru
      _
    %352 = vsyncpa [#allocation5], 1

</llo_original>
